<compile_context>
chip_gen: v6e
topology: v6e:2x2x1
jax: 0.10.0
libtpu: 0.0.40
codegen_flags: <defaults>
</compile_context>

<pallas_src>
import functools
import math

import jax
import jax.numpy as jnp
from jax.experimental import pallas as pl
from jax.experimental.pallas import tpu as pltpu


def _graph_agg_kernel(x_ref, wi_ref, bi_ref, wj_ref, bj_ref, o_ref, *, use_activation):
    """x_ref: (tb, N, F) slab of annotations; weights resident whole-array in VMEM.

    Computes gate = sigmoid(x@Wi+bi), feat = act(x@Wj+bj), then sums gate*feat over
    the node axis and applies the activation again -> (tb, A) lane-dense output block.
    """
    tb, n, f = x_ref.shape
    a = wi_ref.shape[-1]

    # Upcast once into f32 vregs (free on a mem-bound kernel; required on v5e VPU).
    x = x_ref[...].astype(jnp.float32).reshape(tb * n, f)      # layout-preserving merge
    wi = wi_ref[...].astype(jnp.float32)                       # (F, A)
    wj = wj_ref[...].astype(jnp.float32)                       # (F, A)
    bi = bi_ref[...].astype(jnp.float32)                       # (1, A)
    bj = bj_ref[...].astype(jnp.float32)                       # (1, A)

    gate = jax.nn.sigmoid(
        jnp.dot(x, wi, preferred_element_type=jnp.float32) + bi)       # (tb*N, A)
    feat = jnp.dot(x, wj, preferred_element_type=jnp.float32) + bj     # (tb*N, A)
    if use_activation:
        feat = jnp.tanh(feat)

    pooled = jnp.sum((gate * feat).reshape(tb, n, a), axis=1)          # (tb, A)
    if use_activation:
        pooled = jnp.tanh(pooled)

    # TODO(synk): dropout with dropout_rate > 0 in training mode is not implemented
    # (identity here, matching the module default rate=0.0 / eval behavior).
    o_ref[...] = pooled.astype(o_ref.dtype)


def _pick_batch_tile(B, N, F, itemsize=4, target_bytes=2 << 20):
    """Choose the batch tile for the (tb, N, F) input slab / (tb, A) output block.

    Legality: the output block's second-minor dim is tb, so tb must be a multiple of 8
    or the full batch. Preference order: fits the per-tile byte budget, leaves >= 2 grid
    steps (dual-TC v7x), and is as large as possible (amortize ~0.35us/step overhead).
    """
    cands = sorted({tb for tb in range(8, B + 1, 8) if B % tb == 0} | {B})
    fitting = [tb for tb in cands if tb * N * F * itemsize <= target_bytes]
    if not fitting:
        return cands[0]
    multi_step = [tb for tb in fitting if B // tb >= 2]
    return max(multi_step) if multi_step else max(fitting)


def graph_aggregation(out_tensor, w_i, b_i, w_j, b_j, h_tensor=None, use_activation=True):
    """out_tensor: (B, N, F_in); optional h_tensor: (B, N, F_h) concatenated on -1.

    w_i, w_j: (F, A); b_i, b_j: (A,). Returns (B, A).
    """
    annotations = out_tensor
    if h_tensor is not None:  # glue op, stays in plain JAX
        annotations = jnp.concatenate([out_tensor, h_tensor], axis=-1)

    B, N, F = annotations.shape
    Fw, A = w_i.shape
    assert Fw == F and w_j.shape == (F, A)
    assert b_i.shape == (A,) and b_j.shape == (A,)

    bi2 = b_i.reshape(1, A)
    bj2 = b_j.reshape(1, A)

    tb = _pick_batch_tile(B, N, F, itemsize=annotations.dtype.itemsize)
    assert B % tb == 0
    grid = (B // tb,)

    kernel = functools.partial(_graph_agg_kernel, use_activation=use_activation)

    # NOTE: at the model level this op fuses nicely into the producing GCN layer's
    # epilogue; kept standalone here per the module boundary.
    return pl.pallas_call(
        kernel,
        out_shape=jax.ShapeDtypeStruct((B, A), out_tensor.dtype),
        grid_spec=pltpu.PrefetchScalarGridSpec(
            num_scalar_prefetch=0,
            grid=grid,
            in_specs=[
                # (tb, N, F) slab of annotations; last two dims equal full array dims.
                pl.BlockSpec((tb, N, F), lambda b: (b, 0, 0)),
                # Small parameters: whole-array resident in VMEM, one DMA, no pipelining.
                pl.BlockSpec(memory_space=pltpu.MemorySpace.VMEM),  # W_i
                pl.BlockSpec(memory_space=pltpu.MemorySpace.VMEM),  # b_i
                pl.BlockSpec(memory_space=pltpu.MemorySpace.VMEM),  # W_j
                pl.BlockSpec(memory_space=pltpu.MemorySpace.VMEM),  # b_j
            ],
            out_specs=pl.BlockSpec((tb, A), lambda b: (b, 0)),      # lane-dense output
        ),
        compiler_params=pltpu.CompilerParams(
            dimension_semantics=("parallel",),
            vmem_limit_bytes=64 * 1024 * 1024,
        ),
    )(annotations, w_i, bi2, w_j, bj2)


if __name__ == "__main__":
    # Small shapes consistent with the module: B graphs, N nodes, in_features, aux_units.
    B, N, F, A = 2, 8, 32, 128

    key = jax.random.PRNGKey(0)
    k0, k1, k2, k3, k4 = jax.random.split(key, 5)
    x = jax.random.normal(k0, (B, N, F), dtype=jnp.float32)
    w_i = 0.1 * jax.random.normal(k1, (F, A), dtype=jnp.float32)
    b_i = 0.1 * jax.random.normal(k2, (A,), dtype=jnp.float32)
    w_j = 0.1 * jax.random.normal(k3, (F, A), dtype=jnp.float32)
    b_j = 0.1 * jax.random.normal(k4, (A,), dtype=jnp.float32)

    out = graph_aggregation(x, w_i, b_i, w_j, b_j)  # activation=Tanh, dropout=0, h=None
    jax.block_until_ready(out)

    # Pure-JAX reference of the PyTorch forward.
    gate_ref = jax.nn.sigmoid(x @ w_i + b_i)
    feat_ref = jnp.tanh(x @ w_j + b_j)
    ref = jnp.tanh(jnp.sum(gate_ref * feat_ref, axis=1))

    assert out.shape == (B, A)
    assert jnp.allclose(out, ref, atol=1e-4, rtol=1e-4), "mismatch vs reference"
    print("KERNEL_OK")
</pallas_src>

<mosaic_0001>
module attributes {stable_mosaic.version = 11 : i64} {
  func.func @_graph_agg_kernel(%arg0: i32, %arg1: memref<2x8x32xf32, #tpu.memory_space<vmem>>, %arg2: memref<32x128xf32, #tpu.memory_space<vmem>>, %arg3: memref<1x128xf32, #tpu.memory_space<vmem>>, %arg4: memref<32x128xf32, #tpu.memory_space<vmem>>, %arg5: memref<1x128xf32, #tpu.memory_space<vmem>>, %arg6: memref<2x128xf32, #tpu.memory_space<vmem>>) attributes {dimension_semantics = [#tpu.dimension_semantics<parallel>], iteration_bounds = array<i64: 1>, scalar_prefetch = 0 : i64, scratch_operands = 0 : i64, tpu.core_type = #tpu.core_type<tc>, window_params = [{transform_indices = @transform_0, window_bounds = array<i64: 2, 8, 32>}, {pipeline_mode = #tpu.pipeline_mode<synchronous>, transform_indices = @transform_1, window_bounds = array<i64: 32, 128>}, {pipeline_mode = #tpu.pipeline_mode<synchronous>, transform_indices = @transform_2, window_bounds = array<i64: 1, 128>}, {pipeline_mode = #tpu.pipeline_mode<synchronous>, transform_indices = @transform_3, window_bounds = array<i64: 32, 128>}, {pipeline_mode = #tpu.pipeline_mode<synchronous>, transform_indices = @transform_4, window_bounds = array<i64: 1, 128>}, {transform_indices = @transform_5, window_bounds = array<i64: 2, 128>}]} {
    %c0 = arith.constant 0 : index
    %c0_0 = arith.constant 0 : index
    %c0_1 = arith.constant 0 : index
    %0 = vector.load %arg1[%c0, %c0_0, %c0_1] : memref<2x8x32xf32, #tpu.memory_space<vmem>>, vector<2x8x32xf32>
    %1 = vector.shape_cast %0 : vector<2x8x32xf32> to vector<16x32xf32>
    %c0_2 = arith.constant 0 : index
    %c0_3 = arith.constant 0 : index
    %2 = vector.load %arg2[%c0_2, %c0_3] : memref<32x128xf32, #tpu.memory_space<vmem>>, vector<32x128xf32>
    %c0_4 = arith.constant 0 : index
    %c0_5 = arith.constant 0 : index
    %3 = vector.load %arg4[%c0_4, %c0_5] : memref<32x128xf32, #tpu.memory_space<vmem>>, vector<32x128xf32>
    %c0_6 = arith.constant 0 : index
    %c0_7 = arith.constant 0 : index
    %4 = vector.load %arg3[%c0_6, %c0_7] : memref<1x128xf32, #tpu.memory_space<vmem>>, vector<1x128xf32>
    %c0_8 = arith.constant 0 : index
    %c0_9 = arith.constant 0 : index
    %5 = vector.load %arg5[%c0_8, %c0_9] : memref<1x128xf32, #tpu.memory_space<vmem>>, vector<1x128xf32>
    %cst = arith.constant dense<0.000000e+00> : vector<16x128xf32>
    %6 = tpu.matmul %1, %2, %cst {dimension_numbers = #tpu.dot_dimension_numbers<[1], [0], [0], [1], [0, 0, 1, 1], [], []>} : vector<16x32xf32>, vector<32x128xf32>, vector<16x128xf32> -> vector<16x128xf32>
    %7 = vector.broadcast %4 : vector<1x128xf32> to vector<16x128xf32>
    %8 = arith.addf %6, %7 : vector<16x128xf32>
    %9 = arith.negf %8 : vector<16x128xf32>
    %10 = math.exp %9 : vector<16x128xf32>
    %cst_10 = arith.constant 1.000000e+00 : f32
    %11 = vector.broadcast %cst_10 : f32 to vector<16x128xf32>
    %12 = arith.addf %11, %10 : vector<16x128xf32>
    %13 = arith.divf %11, %12 : vector<16x128xf32>
    %cst_11 = arith.constant dense<0.000000e+00> : vector<16x128xf32>
    %14 = tpu.matmul %1, %3, %cst_11 {dimension_numbers = #tpu.dot_dimension_numbers<[1], [0], [0], [1], [0, 0, 1, 1], [], []>} : vector<16x32xf32>, vector<32x128xf32>, vector<16x128xf32> -> vector<16x128xf32>
    %15 = vector.broadcast %5 : vector<1x128xf32> to vector<16x128xf32>
    %16 = arith.addf %14, %15 : vector<16x128xf32>
    %17 = math.tanh %16 : vector<16x128xf32>
    %18 = arith.mulf %13, %17 : vector<16x128xf32>
    %19 = vector.shape_cast %18 : vector<16x128xf32> to vector<2x8x128xf32>
    %cst_12 = arith.constant dense<0.000000e+00> : vector<2x128xf32>
    %20 = vector.multi_reduction <add>, %19, %cst_12 [1] : vector<2x8x128xf32> to vector<2x128xf32>
    %21 = math.tanh %20 : vector<2x128xf32>
    %c0_13 = arith.constant 0 : index
    %c0_14 = arith.constant 0 : index
    %22 = vector.load %arg6[%c0_13, %c0_14] : memref<2x128xf32, #tpu.memory_space<vmem>>, vector<2x128xf32>
    tpu.vector_store %arg6[%c0_13, %c0_14], %21 {strides = array<i32>} : memref<2x128xf32, #tpu.memory_space<vmem>>, vector<2x128xf32>,
    return
  }
  func.func @transform_0(%arg0: i32) -> (i32, i32, i32) {
    %c0_i32 = arith.constant 0 : i32
    %c0_i32_0 = arith.constant 0 : i32
    %c0_i32_1 = arith.constant 0 : i32
    return %arg0, %c0_i32, %c0_i32_0 : i32, i32, i32
  }
  func.func @transform_1(%arg0: i32) -> (i32, i32) {
    %c0_i32 = arith.constant 0 : i32
    %c0_i32_0 = arith.constant 0 : i32
    %c0_i32_1 = arith.constant 0 : i32
    return %c0_i32, %c0_i32_0 : i32, i32
  }
  func.func @transform_2(%arg0: i32) -> (i32, i32) {
    %c0_i32 = arith.constant 0 : i32
    %c0_i32_0 = arith.constant 0 : i32
    %c0_i32_1 = arith.constant 0 : i32
    return %c0_i32, %c0_i32_0 : i32, i32
  }
  func.func @transform_3(%arg0: i32) -> (i32, i32) {
    %c0_i32 = arith.constant 0 : i32
    %c0_i32_0 = arith.constant 0 : i32
    %c0_i32_1 = arith.constant 0 : i32
    return %c0_i32, %c0_i32_0 : i32, i32
  }
  func.func @transform_4(%arg0: i32) -> (i32, i32) {
    %c0_i32 = arith.constant 0 : i32
    %c0_i32_0 = arith.constant 0 : i32
    %c0_i32_1 = arith.constant 0 : i32
    return %c0_i32, %c0_i32_0 : i32, i32
  }
  func.func @transform_5(%arg0: i32) -> (i32, i32) {
    %c0_i32 = arith.constant 0 : i32
    %c0_i32_0 = arith.constant 0 : i32
    return %arg0, %c0_i32 : i32, i32
  }
}

</mosaic_0001>

<llo_original>
// kernel: tpu_custom_call.1
$region0: #{tpu_custom_call.1}
  #allocation0 [shape = 'u32[]', space=smem, size = 0x4, offset = 0x4, fixed_abs, tag = 'smem constant byte address 0x4 - core index']
  #allocation1 [shape = 'u32[144,128]{1,0:T(1,128)}', space=vmem, size = 0x12000, scoped, tag = 'internal scratch']
  %s0 = inlined_call_operand.hbm [shape: f32[2,8,32], index: 0, kind: input, shape index: {}]
  %s1 = inlined_call_operand.hbm [shape: f32[32,128], index: 1, kind: input, shape index: {}]
  %s2 = inlined_call_operand.vmem [shape: f32[1,128], index: 2, kind: input, shape index: {}]
  %s3 = inlined_call_operand.hbm [shape: f32[32,128], index: 3, kind: input, shape index: {}]
  %s4 = inlined_call_operand.vmem [shape: f32[1,128], index: 4, kind: input, shape index: {}]
  %s5 = inlined_call_operand.hbm [shape: f32[2,128], index: 5, kind: output, shape index: {}]
  %s6 = sld [smem:[#allocation0]]
  $region42: #{tpu_custom_call.1} parent=0
    _
  %s8 = ssub.s32 1, %s6
  %s9 = scalar_select 0, %s8, %s6
  $region1: #{tpu_custom_call.1} parent=0
    #allocation2 [shape = 'u8[8192]{0}', space=vmem, size = 0x2000, scoped, tag = 'input window, operand 0, single buffered']
    #allocation3 [shape = 's32[1]{0}', space=sflag, size = 0x4, scoped, tag = 'scoped memory for tpu_custom_call.1']
    #allocation4 [shape = 's32[1]{0}', space=sflag, size = 0x4, scoped, tag = 'scoped memory for tpu_custom_call.1']
    #allocation5 [shape = 'u8[16384]{0}', space=vmem, size = 0x4000, scoped, tag = 'input window, operand 1, single buffered']
    #allocation6 [shape = 's32[1]{0}', space=sflag, size = 0x4, scoped, tag = 'scoped memory for tpu_custom_call.1']
    #allocation7 [shape = 'u8[16384]{0}', space=vmem, size = 0x4000, scoped, tag = 'input window, operand 3, single buffered']
    #allocation8 [shape = 'u8[1024]{0}', space=vmem, size = 0x400, scoped, tag = 'output window, operand 0, single buffered']
    %10 = vsyncpa [#allocation3], 0
    %11 = vsyncpa [#allocation6], 0
    %12 = vsyncpa [#allocation4], 0
    // Predicated region
    $region2: #{tpu_custom_call.1} parent=1 // pred_check
      _
    $region3: #{tpu_custom_call.1} parent=1 // pred_check_branch
      %14 = sbr.rel (0) target = $region5
    $region4: #{tpu_custom_call.1} parent=1 // pred_region
      %s16 = ssub.s32 256, 256
      %17 = vsyncadd [#allocation3], %s16
      %s18 = sshll.u32 [#allocation2], 4
      %s19 = int_to_ptr.vmem [resolvable:$true] %s18
      %24 = dma.hbm_to_vmem [thread:$0]  %s0, 256, %s19, [#allocation3], 128, 128, 8
    $region5: #{tpu_custom_call.1} parent=1 // pred_fallthru
      _
    // Predicated region
    $region6: #{tpu_custom_call.1} parent=1 // pred_check
      _
    $region7: #{tpu_custom_call.1} parent=1 // pred_check_branch
      %26 = sbr.rel (0) target = $region9
    $region8: #{tpu_custom_call.1} parent=1 // pred_region
      %s28 = ssub.s32 512, 512
      %29 = vsyncadd [#allocation6], %s28
      %s30 = sshll.u32 [#allocation5], 4
      %s31 = int_to_ptr.vmem [resolvable:$true] %s30
      %36 = dma.hbm_to_vmem [thread:$0]  %s1, 512, %s31, [#allocation6], 128, 128, 8
    $region9: #{tpu_custom_call.1} parent=1 // pred_fallthru
      _
    // Predicated region
    $region10: #{tpu_custom_call.1} parent=1 // pred_check
      _
    $region11: #{tpu_custom_call.1} parent=1 // pred_check_branch
      %38 = sbr.rel (0) target = $region13
    $region12: #{tpu_custom_call.1} parent=1 // pred_region
      _
    $region13: #{tpu_custom_call.1} parent=1 // pred_fallthru
      _
    // Predicated region
    $region14: #{tpu_custom_call.1} parent=1 // pred_check
      _
    $region15: #{tpu_custom_call.1} parent=1 // pred_check_branch
      %40 = sbr.rel (0) target = $region17
    $region16: #{tpu_custom_call.1} parent=1 // pred_region
      %s42 = ssub.s32 512, 512
      %43 = vsyncadd [#allocation6], %s42
      %s44 = sshll.u32 [#allocation7], 4
      %s45 = int_to_ptr.vmem [resolvable:$true] %s44
      %50 = dma.hbm_to_vmem [thread:$0]  %s3, 512, %s45, [#allocation6], 128, 128, 8
    $region17: #{tpu_custom_call.1} parent=1 // pred_fallthru
      _
    // Predicated region
    $region18: #{tpu_custom_call.1} parent=1 // pred_check
      _
    $region19: #{tpu_custom_call.1} parent=1 // pred_check_branch
      %52 = sbr.rel (0) target = $region21
    $region20: #{tpu_custom_call.1} parent=1 // pred_region
      _
    $region21: #{tpu_custom_call.1} parent=1 // pred_fallthru
      _
    // Predicated region
    $region22: #{tpu_custom_call.1} parent=1 // pred_check
      _
    $region23: #{tpu_custom_call.1} parent=1 // pred_check_branch
      %54 = sbr.rel (0) target = $region25
    $region24: #{tpu_custom_call.1} parent=1 // pred_region
      %55 = dma.done [#allocation3], 256
    $region25: #{tpu_custom_call.1} parent=1 // pred_fallthru
      _
    // Predicated region
    $region26: #{tpu_custom_call.1} parent=1 // pred_check
      _
    $region27: #{tpu_custom_call.1} parent=1 // pred_check_branch
      %57 = sbr.rel (0) target = $region29
    $region28: #{tpu_custom_call.1} parent=1 // pred_region
      %58 = dma.done [#allocation6], 512
    $region29: #{tpu_custom_call.1} parent=1 // pred_fallthru
      _
    // Predicated region
    $region30: #{tpu_custom_call.1} parent=1 // pred_check
      _
    $region31: #{tpu_custom_call.1} parent=1 // pred_check_branch
      %60 = sbr.rel (0) target = $region33
    $region32: #{tpu_custom_call.1} parent=1 // pred_region
      %61 = dma.done [#allocation6], 512
    $region33: #{tpu_custom_call.1} parent=1 // pred_fallthru
      _
    %v62 = vld [vmem:[#allocation2] sm:$0xff]
    %v63 = vld [vmem:[#allocation2 + $0x8] sm:$0xff]
    %v64 = vld [vmem:[#allocation5] sm:$0xff]
    %v65 = vld [vmem:[#allocation5 + $0x8] sm:$0xff]
    %v66 = vld [vmem:[#allocation5 + $0x10] sm:$0xff]
    %v67 = vld [vmem:[#allocation5 + $0x18] sm:$0xff]
    %v68 = vld [vmem:[#allocation7] sm:$0xff]
    %v69 = vld [vmem:[#allocation7 + $0x8] sm:$0xff]
    %v70 = vld [vmem:[#allocation7 + $0x10] sm:$0xff]
    %v71 = vld [vmem:[#allocation7 + $0x18] sm:$0xff]
    %v72 = vld [vmem:[%s2] sm:$0x1]
    %v73 = vld [vmem:[%s4] sm:$0x1]
    %v75 = vlaneseq
    %v76 = vshrl.u32 %v75, 7
    %v77 = vsub.s32 0, %v76
    %v78 = vrot.slane %v72, %v77
    %vm80 = vcmask 261120
    %v82 = vsel %vm80, %v62, 0
    %v85 = vsel %vm80, %v63, 0
    %87 = vmatprep.subr.mxu0 0.0
    %88 = vmatpush1.msra.mxu0 0.0
    %89 = vmatprep.subr.mxu0 0.0
    %90 = vmatpush1.msra.mxu0 0.0
    %91 = vmatprep.subr.mxu0 0.0
    %92 = vmatpush1.msra.mxu0 0.0
    %93 = vmatprep.subr.mxu0 0.0
    %94 = vmatpush1.msra.mxu0 0.0
    %95 = vmatprep.subr.mxu0 0.0
    %96 = vmatpush1.msra.mxu0 0.0
    %97 = vmatprep.subr.mxu0 0.0
    %98 = vmatpush1.msra.mxu0 0.0
    %99 = vmatprep.subr.mxu0 0.0
    %100 = vmatpush1.msra.mxu0 0.0
    %101 = vmatprep.subr.mxu0 0.0
    %102 = vmatpush1.msra.mxu0 0.0
    %103 = vmatprep.subr.mxu0 0.0
    %104 = vmatpush1.msra.mxu0 0.0
    %105 = vmatprep.subr.mxu0 0.0
    %106 = vmatpush1.msra.mxu0 0.0
    %107 = vmatprep.subr.mxu0 0.0
    %108 = vmatpush1.msra.mxu0 0.0
    %109 = vmatprep.subr.mxu0 0.0
    %110 = vmatpush1.msra.mxu0 0.0
    %111 = vmatprep.subr.mxu0 0.0
    %112 = vmatpush1.msra.mxu0 %v67
    %113 = vmatprep.subr.mxu0 0.0
    %114 = vmatpush1.msra.mxu0 %v66
    %115 = vmatprep.subr.mxu0 0.0
    %116 = vmatpush1.msra.mxu0 %v65
    %117 = vmatprep.subr.mxu0 0.0
    %118 = vmatpush1.msra.mxu0 %v64
    %119 = vmatprep.subr.mxu0 0.0
    %120 = vmatpush2.msra.mxu0 0.0
    %121 = vmatprep.subr.mxu0 0.0
    %122 = vmatpush2.msra.mxu0 0.0
    %123 = vmatprep.subr.mxu0 0.0
    %124 = vmatpush2.msra.mxu0 0.0
    %125 = vmatprep.subr.mxu0 0.0
    %126 = vmatpush2.msra.mxu0 0.0
    %127 = vmatprep.subr.mxu0 0.0
    %128 = vmatpush2.msra.mxu0 0.0
    %129 = vmatprep.subr.mxu0 0.0
    %130 = vmatpush2.msra.mxu0 0.0
    %131 = vmatprep.subr.mxu0 0.0
    %132 = vmatpush2.msra.mxu0 0.0
    %133 = vmatprep.subr.mxu0 0.0
    %134 = vmatpush2.msra.mxu0 0.0
    %135 = vmatprep.subr.mxu0 0.0
    %136 = vmatpush2.msra.mxu0 0.0
    %137 = vmatprep.subr.mxu0 0.0
    %138 = vmatpush2.msra.mxu0 0.0
    %139 = vmatprep.subr.mxu0 0.0
    %140 = vmatpush2.msra.mxu0 0.0
    %141 = vmatprep.subr.mxu0 0.0
    %142 = vmatpush2.msra.mxu0 0.0
    %143 = vmatprep.subr.mxu0 0.0
    %144 = vmatpush2.msra.mxu0 0.0
    %145 = vmatprep.subr.mxu0 0.0
    %146 = vmatpush2.msra.mxu0 0.0
    %147 = vmatprep.subr.mxu0 0.0
    %148 = vmatpush2.msra.mxu0 0.0
    %149 = vmatprep.subr.mxu0 0.0
    %150 = vmatpush2.msra.mxu0 0.0
    %151 = vmatprep.mubr.f32.mxu0 0.0
    %152 = vmatmul.mubr.f32.gmra.mxu0 %v82
    %v153 = vpop.f32.mrf.mxu0
    %v154 = vadd.f32 %v78, %v153
    %v155 = vpop.f32.mrf.mxu0
    %156 = vmatprep.mubr.f32.mxu0 0.0
    %157 = vmatmul.mubr.f32.gmra.mxu0 %v85
    %v158 = vpop.f32.mrf.mxu0
    %v159 = vadd.f32 %v78, %v158
    %v160 = vpop.f32.mrf.mxu0
    %161 = vdwg.mxu0
    %v162 = vxor.u32 %v154, 2147483648
    %v163 = vxor.u32 %v159, 2147483648
    %v164 = vmul.f32 %v162, 1.442695
    %v165 = vpow.pop %v164
    %v166 = vmul.f32 %v163, 1.442695
    %v167 = vpow.pop %v166
    %v168 = vadd.f32 %v165, 1.0
    %v169 = vadd.f32 %v167, 1.0
    %v170 = vrcp.pop %v168
    %v171 = vmul.f32 1.0, %v170
    %v172 = vrcp.pop %v169
    %v173 = vmul.f32 1.0, %v172
    %v175 = vlaneseq
    %v176 = vshrl.u32 %v175, 7
    %v177 = vsub.s32 0, %v176
    %v178 = vrot.slane %v73, %v177
    %180 = vmatprep.subr.mxu0 0.0
    %181 = vmatpush1.msra.mxu0 0.0
    %182 = vmatprep.subr.mxu0 0.0
    %183 = vmatpush1.msra.mxu0 0.0
    %184 = vmatprep.subr.mxu0 0.0
    %185 = vmatpush1.msra.mxu0 0.0
    %186 = vmatprep.subr.mxu0 0.0
    %187 = vmatpush1.msra.mxu0 0.0
    %188 = vmatprep.subr.mxu0 0.0
    %189 = vmatpush1.msra.mxu0 0.0
    %190 = vmatprep.subr.mxu0 0.0
    %191 = vmatpush1.msra.mxu0 0.0
    %192 = vmatprep.subr.mxu0 0.0
    %193 = vmatpush1.msra.mxu0 0.0
    %194 = vmatprep.subr.mxu0 0.0
    %195 = vmatpush1.msra.mxu0 0.0
    %196 = vmatprep.subr.mxu0 0.0
    %197 = vmatpush1.msra.mxu0 0.0
    %198 = vmatprep.subr.mxu0 0.0
    %199 = vmatpush1.msra.mxu0 0.0
    %200 = vmatprep.subr.mxu0 0.0
    %201 = vmatpush1.msra.mxu0 0.0
    %202 = vmatprep.subr.mxu0 0.0
    %203 = vmatpush1.msra.mxu0 0.0
    %204 = vmatprep.subr.mxu0 0.0
    %205 = vmatpush1.msra.mxu0 %v71
    %206 = vmatprep.subr.mxu0 0.0
    %207 = vmatpush1.msra.mxu0 %v70
    %208 = vmatprep.subr.mxu0 0.0
    %209 = vmatpush1.msra.mxu0 %v69
    %210 = vmatprep.subr.mxu0 0.0
    %211 = vmatpush1.msra.mxu0 %v68
    %212 = vmatprep.subr.mxu0 0.0
    %213 = vmatpush2.msra.mxu0 0.0
    %214 = vmatprep.subr.mxu0 0.0
    %215 = vmatpush2.msra.mxu0 0.0
    %216 = vmatprep.subr.mxu0 0.0
    %217 = vmatpush2.msra.mxu0 0.0
    %218 = vmatprep.subr.mxu0 0.0
    %219 = vmatpush2.msra.mxu0 0.0
    %220 = vmatprep.subr.mxu0 0.0
    %221 = vmatpush2.msra.mxu0 0.0
    %222 = vmatprep.subr.mxu0 0.0
    %223 = vmatpush2.msra.mxu0 0.0
    %224 = vmatprep.subr.mxu0 0.0
    %225 = vmatpush2.msra.mxu0 0.0
    %226 = vmatprep.subr.mxu0 0.0
    %227 = vmatpush2.msra.mxu0 0.0
    %228 = vmatprep.subr.mxu0 0.0
    %229 = vmatpush2.msra.mxu0 0.0
    %230 = vmatprep.subr.mxu0 0.0
    %231 = vmatpush2.msra.mxu0 0.0
    %232 = vmatprep.subr.mxu0 0.0
    %233 = vmatpush2.msra.mxu0 0.0
    %234 = vmatprep.subr.mxu0 0.0
    %235 = vmatpush2.msra.mxu0 0.0
    %236 = vmatprep.subr.mxu0 0.0
    %237 = vmatpush2.msra.mxu0 0.0
    %238 = vmatprep.subr.mxu0 0.0
    %239 = vmatpush2.msra.mxu0 0.0
    %240 = vmatprep.subr.mxu0 0.0
    %241 = vmatpush2.msra.mxu0 0.0
    %242 = vmatprep.subr.mxu0 0.0
    %243 = vmatpush2.msra.mxu0 0.0
    %244 = vmatprep.mubr.f32.mxu0 0.0
    %245 = vmatmul.mubr.f32.gmra.mxu0 %v82
    %v246 = vpop.f32.mrf.mxu0
    %v247 = vadd.f32 %v178, %v246
    %v248 = vpop.f32.mrf.mxu0
    %249 = vmatprep.mubr.f32.mxu0 0.0
    %250 = vmatmul.mubr.f32.gmra.mxu0 %v85
    %v251 = vpop.f32.mrf.mxu0
    %v252 = vadd.f32 %v178, %v251
    %v253 = vpop.f32.mrf.mxu0
    %254 = vdwg.mxu0
    %v255 = vtanh.pop %v247
    %v256 = vtanh.pop %v252
    %v257 = vmul.f32 %v171, %v255
    %v258 = vmul.f32 %v173, %v256
    %v259 = vrot.slane %v257, 4
    %v260 = vadd.f32 %v257, %v259
    %v261 = vrot.slane %v260, 2
    %v262 = vadd.f32 %v260, %v261
    %v263 = vrot.slane %v262, 1
    %v264 = vadd.f32 %v262, %v263
    %v265 = vrot.slane %v258, 4
    %v266 = vadd.f32 %v258, %v265
    %v267 = vrot.slane %v266, 2
    %v268 = vadd.f32 %v266, %v267
    %v269 = vrot.slane %v268, 1
    %v270 = vadd.f32 %v268, %v269
    %v271 = vtanh.pop %v264
    %v272 = vtanh.pop %v270
    %vm275 = vcmask 1041409
    %v276 = vsel %vm275, %v272, %v271
    %278 = vst [vmem:[#allocation8] sm:$0x3] %v276
    // Predicated region
    $region34: #{tpu_custom_call.1} parent=1 // pred_check
      _
    $region35: #{tpu_custom_call.1} parent=1 // pred_check_branch
      %280 = sbr.rel (0) target = $region37
    $region36: #{tpu_custom_call.1} parent=1 // pred_region
      %s282 = ssub.s32 32, 32
      %283 = vsyncadd [#allocation4], %s282
      %s285 = sshll.u32 [#allocation8], 4
      %s286 = int_to_ptr.vmem [resolvable:$true] %s285
      %288 = dma.vmem_to_hbm [thread:$0]  %s286, 32, %s5, [#allocation4]
    $region37: #{tpu_custom_call.1} parent=1 // pred_fallthru
      _
    // Predicated region
    $region38: #{tpu_custom_call.1} parent=1 // pred_check
      _
    $region39: #{tpu_custom_call.1} parent=1 // pred_check_branch
      %290 = sbr.rel (0) target = $region41
    $region40: #{tpu_custom_call.1} parent=1 // pred_region
      %291 = dma.done [#allocation4], 32
    $region41: #{tpu_custom_call.1} parent=1 // pred_fallthru
      _
    %292 = vsyncpa [#allocation3], 1
    %293 = vsyncpa [#allocation6], 1
    %294 = vsyncpa [#allocation4], 1

</llo_original>
